<compile_context>
chip_gen: v7x
topology: tpu7x:2x2x1
jax: 0.10.0
libtpu: 0.0.40
codegen_flags: <defaults>
</compile_context>

<pallas_src>
import math

import jax
import jax.numpy as jnp
import numpy as np
from jax.experimental import pallas as pl
from jax.experimental.pallas import tpu as pltpu


# ----------------------------- sizing helpers --------------------------------
def _ceil_to(a, m):
    return ((a + m - 1) // m) * m


def _pad2(r, c, sub, lane):
    return _ceil_to(max(r, 1), sub) * _ceil_to(max(c, 1), lane)


def _vmem_capacity_bytes():
    """Physical VMEM of the current chip; conservative 64 MiB (v7x) fallback."""
    try:
        cap = int(pltpu.get_tpu_info().vmem_capacity_bytes)
        if cap > 0:
            return cap
    except Exception:
        pass
    return 64 << 20


def _pick_h_tile(D, H, weight_budget_bytes):
    """Largest H tile s.t. double-buffered bf16 W1 + W2 tiles fit the budget.

    Per grid step we hold a (D, th) W1 tile and a (th, D) W2 tile in bf16,
    double-buffered -> ~8 * D * th bytes.  Only when the whole expert fits in
    one tile (nh == 1) do consecutive same-expert slots skip the weight
    re-DMA; for nh > 1 the weight stream restarts at every slot.  The budget
    is therefore generation-dependent (~90 MiB on 128 MiB parts, ~45 MiB on
    v7x) to keep nh == 1 for as large an H as possible.
    """
    max_th = max(weight_budget_bytes // (8 * D), 1)
    if H <= max_th:
        return H
    t = (max_th // 128) * 128
    while t >= 128:
        if H % t == 0:
            return t
        t -= 128
    # TODO(synk): ragged H (not a multiple of 128) falls back to the full H
    # tile; correct, but can exceed the VMEM budget for huge ragged H.
    return H


def _vmem_limit_bytes(S, D, th, nh, cap):
    bf, f32 = 2, 4
    per_step = (
        _pad2(S, D, 16, 128) * bf      # x block (bf16)
        + _pad2(D, th, 16, 128) * bf   # W1 tile (bf16)
        + _pad2(th, D, 16, 128) * bf   # W2 tile (bf16)
        + _pad2(1, th, 8, 128) * f32   # b1 tile (f32)
        + _pad2(1, D, 8, 128) * f32    # b2 (f32)
        + _pad2(S, D, 16, 128) * bf    # output block (bf16)
    )
    acc = _pad2(S, D, 8, 128) * f32 if nh > 1 else 0
    est = 2 * per_step + acc + (4 << 20)        # double-buffer + scratch + slack
    hi = max(cap - (8 << 20), 16 << 20)         # never above physical VMEM
    lo = min(32 << 20, hi)
    return int(min(max(est, lo), hi))


# ----------------- expert MLP kernels (nh == 1 fast path + tiled) ------------
def _gelu(h, approximate):
    if approximate:
        # tanh approximation: tanh runs on the EUP slot (co-issues with MXU/VALU).
        c = math.sqrt(2.0 / math.pi)
        return 0.5 * h * (1.0 + jnp.tanh(c * (h + 0.044715 * h * h * h)))
    # exact erf GELU, matching torch.nn.GELU()'s default
    return 0.5 * h * (1.0 + jax.lax.erf(h * (1.0 / math.sqrt(2.0))))


def _make_expert_kernel(nh, gelu_approximate):
    if nh == 1:
        # Whole expert in one H tile: no accumulator scratch, no predicated
        # regions, one lane-dense bf16 store per slot.
        def kernel(b_map_ref, e_map_ref, o_map_ref, x_ref, w1_ref, b1_ref,
                   w2_ref, b2_ref, o_ref):
            x = x_ref[0]                                                # (S, D) bf16
            hid = jnp.dot(x, w1_ref[0],
                          preferred_element_type=jnp.float32) + b1_ref[0]
            hid = _gelu(hid, gelu_approximate)
            y = jnp.dot(hid.astype(jnp.bfloat16), w2_ref[0],
                        preferred_element_type=jnp.float32) + b2_ref[0]
            o_ref[...] = y[None].astype(o_ref.dtype)

        return kernel

    def kernel(b_map_ref, e_map_ref, o_map_ref, x_ref, w1_ref, b1_ref,
               w2_ref, b2_ref, o_ref, acc_ref):
        # grid = (sorted slot, H tile); inner H axis is the W2 reduction.
        h = pl.program_id(1)

        x = x_ref[0]                                                    # (S, D) bf16
        hid = jnp.dot(x, w1_ref[0],
                      preferred_element_type=jnp.float32) + b1_ref[0]
        hid = _gelu(hid, gelu_approximate)
        part = jnp.dot(hid.astype(jnp.bfloat16), w2_ref[0],
                       preferred_element_type=jnp.float32)              # (S, D) f32

        @pl.when(h == 0)
        def _():
            acc_ref[...] = part

        @pl.when(h > 0)
        def _():
            acc_ref[...] += part

        @pl.when(h == nh - 1)
        def _():
            o_ref[...] = (acc_ref[...] + b2_ref[0])[None].astype(o_ref.dtype)

    return kernel


# --------------------------------- forward -----------------------------------
def moe_mlp_forward(x, params, top_k=2, *, gelu_approximate=False, h_tile=None):
    B, S, D = x.shape
    wg, bg = params["wg"], params["bg"]
    w1, b1, w2, b2 = params["w1"], params["b1"], params["w2"], params["b2"]
    E = wg.shape[1]
    H = w1.shape[2]
    K = top_k
    N = B * K                        # number of (batch, top-k slot) work items

    # ---- gating: tiny (B*S,D)x(D,E) matmul, lane-sparse output -> keep in XLA.
    logits = (jnp.dot(x.reshape(B * S, D), wg,
                      precision=jax.lax.Precision.HIGHEST) + bg).reshape(B, S, E)
    topv, topi = jax.lax.top_k(logits, K)                 # (B, S, K)
    gate_scores = jax.nn.softmax(topv, axis=-1)           # per-token weights, f32

    # PyTorch quirk (intentional): expert for the whole sequence x[b] in slot i
    # is top_k_indices.view(-1)[b] = topi[b // S, b % S, i].
    eidx = topi.reshape(B * S, K)[:B].astype(jnp.int32)             # (B, K)

    # ---- group the B*K slots by expert so consecutive grid steps reuse weights.
    e_flat = eidx.reshape(N)                                        # expert per slot
    order = jnp.argsort(e_flat).astype(jnp.int32)        # sorted pos -> original slot
    e_sorted = jnp.take(e_flat, order).astype(jnp.int32)
    b_sorted = (order // K).astype(jnp.int32)            # sorted pos -> batch
    o_map = order                                        # write at ORIGINAL slot idx

    # ---- bf16 operands for the MXU; biases stay f32, accumulation in f32.
    x_bf = x.astype(jnp.bfloat16)
    w1_bf = w1.astype(jnp.bfloat16)
    w2_bf = w2.astype(jnp.bfloat16)
    # TODO(synk): fp8 (v7x) / int8 (v5e,v6e) expert weights with per-channel
    # scales would halve the dominant weight HBM stream again; not done here.

    cap = _vmem_capacity_bytes()
    th = h_tile if h_tile is not None else _pick_h_tile(D, H, (cap * 7) // 10)
    assert H % th == 0
    nh = H // th
    vmem_limit = _vmem_limit_bytes(S, D, th, nh, cap)

    scratch = [] if nh == 1 else [pltpu.VMEM((S, D), jnp.float32)]

    grid_spec = pltpu.PrefetchScalarGridSpec(
        num_scalar_prefetch=3,                   # b_sorted, e_sorted, o_map (SMEM)
        grid=(N, nh),                            # (sorted slot, H tile)
        in_specs=[
            # x: constant across the inner H axis -> fetched once per slot.
            pl.BlockSpec((1, S, D), lambda s, h, bm, em, om: (bm[s], 0, 0)),
            # expert weights: block index depends only on the *sorted* expert id,
            # so consecutive same-expert slots skip the weight re-DMA (nh == 1).
            pl.BlockSpec((1, D, th), lambda s, h, bm, em, om: (em[s], 0, h)),   # W1
            pl.BlockSpec((1, 1, th), lambda s, h, bm, em, om: (em[s], 0, h)),   # b1
            pl.BlockSpec((1, th, D), lambda s, h, bm, em, om: (em[s], h, 0)),   # W2
            pl.BlockSpec((1, 1, D), lambda s, h, bm, em, om: (em[s], 0, 0)),    # b2
        ],
        # lane-dense (S, D) bf16 block, written once per slot at the last H tile,
        # straight to the ORIGINAL slot index -> no scatter/gather epilogue.
        out_specs=pl.BlockSpec((1, S, D), lambda s, h, bm, em, om: (om[s], 0, 0)),
        scratch_shapes=scratch,
    )
    out_slots = pl.pallas_call(
        _make_expert_kernel(nh, gelu_approximate),
        out_shape=jax.ShapeDtypeStruct((N, S, D), jnp.bfloat16),
        grid_spec=grid_spec,
        compiler_params=pltpu.CompilerParams(
            # slot axis shards across v7x's 2 TensorCores; H axis is the
            # output-resident reduction.
            dimension_semantics=("parallel", "arbitrary"),
            vmem_limit_bytes=vmem_limit,
        ),
    )(b_sorted, e_sorted, o_map, x_bf, w1_bf, b1, w2_bf, b2)

    # Epilogue: per-token gate scale + sum over the K slots, all in f32.
    out_slots = out_slots.astype(jnp.float32).reshape(B, K, S, D)
    gate_bks = jnp.transpose(gate_scores, (0, 2, 1))                # (B, K, S)
    return jnp.sum(gate_bks[..., None] * out_slots, axis=1)        # (B, S, D) f32
    # TODO(synk): a true grouped GEMM (gather per-expert row slabs, grid over
    # experts x row tiles x H tiles, scalar-prefetched group offsets) would make
    # weight reuse independent of nh and feed the MXU a taller M.


# ----------------------------- pure-JAX reference ----------------------------
def moe_mlp_reference(x, params, top_k=2):
    B, S, D = x.shape
    wg, bg = params["wg"], params["bg"]
    w1, b1, w2, b2 = params["w1"], params["b1"], params["w2"], params["b2"]
    K = top_k
    hi = jax.lax.Precision.HIGHEST

    logits = jnp.dot(x.reshape(B * S, D), wg, precision=hi).reshape(B, S, -1) + bg
    topv, topi = jax.lax.top_k(logits, K)
    gate_scores = jax.nn.softmax(topv, axis=-1)
    eidx = np.asarray(topi.reshape(B * S, K)[:B])

    out = jnp.zeros_like(x)
    for i in range(K):
        for b in range(B):
            e = int(eidx[b, i])
            h = jnp.dot(x[b], w1[e], precision=hi) + b1[e]
            h = 0.5 * h * (1.0 + jax.lax.erf(h / math.sqrt(2.0)))
            y = jnp.dot(h, w2[e], precision=hi) + b2[e]
            out = out.at[b].add(gate_scores[b, :, i : i + 1] * y)
    return out


# ---------------------------------- main --------------------------------------
if __name__ == "__main__":
    # small shapes consistent with the module (in_features=D, hidden_features=H),
    # chosen lane/MXU friendly: D a multiple of 128, S big enough to feed the MXU.
    B, S, D, H, E, K = 2, 128, 128, 256, 8, 2

    key = jax.random.PRNGKey(0)
    ks = jax.random.split(key, 7)
    x = jax.random.normal(ks[0], (B, S, D), jnp.float32)

    params = {
        "wg": jax.random.normal(ks[1], (D, E), jnp.float32) / math.sqrt(D),
        "bg": jax.random.normal(ks[2], (1, E), jnp.float32) * 0.01,
        "w1": jax.random.normal(ks[3], (E, D, H), jnp.float32) / math.sqrt(D),
        "b1": jax.random.normal(ks[4], (E, 1, H), jnp.float32) * 0.01,
        "w2": jax.random.normal(ks[5], (E, H, D), jnp.float32) / math.sqrt(H),
        "b2": jax.random.normal(ks[6], (E, 1, D), jnp.float32) * 0.01,
    }

    ref = moe_mlp_reference(x, params, top_k=K)

    # default path: whole expert in one H tile (nh == 1), accumulator-free.
    out = jax.block_until_ready(moe_mlp_forward(x, params, top_k=K))
    # bf16 MXU operands / bf16 per-slot output vs. f32 HIGHEST-precision reference.
    np.testing.assert_allclose(np.asarray(out), np.asarray(ref), rtol=5e-2, atol=5e-2)

    # forced H tiling (nh == 2) to also exercise the accumulator reduction path.
    out_tiled = jax.block_until_ready(
        moe_mlp_forward(x, params, top_k=K, h_tile=128))
    np.testing.assert_allclose(np.asarray(out_tiled), np.asarray(ref),
                               rtol=5e-2, atol=5e-2)

    print("KERNEL_OK")
</pallas_src>

<mosaic_0001>
module attributes {stable_mosaic.version = 11 : i64} {
  func.func @kernel(%arg0: i32, %arg1: i32, %arg2: memref<4xi32, #tpu.memory_space<smem>>, %arg3: memref<4xi32, #tpu.memory_space<smem>>, %arg4: memref<4xi32, #tpu.memory_space<smem>>, %arg5: memref<1x128x128xbf16, #tpu.memory_space<vmem>>, %arg6: memref<1x128x256xbf16, #tpu.memory_space<vmem>>, %arg7: memref<1x1x256xf32, #tpu.memory_space<vmem>>, %arg8: memref<1x256x128xbf16, #tpu.memory_space<vmem>>, %arg9: memref<1x1x128xf32, #tpu.memory_space<vmem>>, %arg10: memref<1x128x128xbf16, #tpu.memory_space<vmem>>) attributes {dimension_semantics = [#tpu.dimension_semantics<parallel>, #tpu.dimension_semantics<arbitrary>], iteration_bounds = array<i64: 4, 1>, scalar_prefetch = 3 : i64, scratch_operands = 0 : i64, tpu.core_type = #tpu.core_type<tc>, window_params = [{transform_indices = @transform_0, window_bounds = array<i64: 1, 128, 128>}, {transform_indices = @transform_1, window_bounds = array<i64: 1, 128, 256>}, {transform_indices = @transform_2, window_bounds = array<i64: 1, 1, 256>}, {transform_indices = @transform_3, window_bounds = array<i64: 1, 256, 128>}, {transform_indices = @transform_4, window_bounds = array<i64: 1, 1, 128>}, {transform_indices = @transform_5, window_bounds = array<i64: 1, 128, 128>}]} {
    %c0 = arith.constant 0 : index
    %c0_0 = arith.constant 0 : index
    %c0_1 = arith.constant 0 : index
    %0 = vector.load %arg5[%c0, %c0_0, %c0_1] : memref<1x128x128xbf16, #tpu.memory_space<vmem>>, vector<1x128x128xbf16>
    %1 = vector.shape_cast %0 : vector<1x128x128xbf16> to vector<128x128xbf16>
    %c0_2 = arith.constant 0 : index
    %c0_3 = arith.constant 0 : index
    %c0_4 = arith.constant 0 : index
    %2 = vector.load %arg6[%c0_2, %c0_3, %c0_4] : memref<1x128x256xbf16, #tpu.memory_space<vmem>>, vector<1x128x256xbf16>
    %3 = vector.shape_cast %2 : vector<1x128x256xbf16> to vector<128x256xbf16>
    %cst = arith.constant dense<0.000000e+00> : vector<128x256xf32>
    %4 = tpu.matmul %1, %3, %cst {dimension_numbers = #tpu.dot_dimension_numbers<[1], [0], [0], [1], [0, 0, 1, 1], [], []>} : vector<128x128xbf16>, vector<128x256xbf16>, vector<128x256xf32> -> vector<128x256xf32>
    %c0_5 = arith.constant 0 : index
    %c0_6 = arith.constant 0 : index
    %c0_7 = arith.constant 0 : index
    %5 = vector.load %arg7[%c0_5, %c0_6, %c0_7] : memref<1x1x256xf32, #tpu.memory_space<vmem>>, vector<1x1x256xf32>
    %6 = vector.shape_cast %5 : vector<1x1x256xf32> to vector<1x256xf32>
    %7 = vector.broadcast %6 : vector<1x256xf32> to vector<128x256xf32>
    %8 = arith.addf %4, %7 : vector<128x256xf32>
    %cst_8 = arith.constant 5.000000e-01 : f32
    %9 = vector.broadcast %cst_8 : f32 to vector<128x256xf32>
    %10 = arith.mulf %9, %8 : vector<128x256xf32>
    %cst_9 = arith.constant 0.707106769 : f32
    %11 = vector.broadcast %cst_9 : f32 to vector<128x256xf32>
    %12 = arith.mulf %8, %11 : vector<128x256xf32>
    %13 = math.erf %12 : vector<128x256xf32>
    %cst_10 = arith.constant 1.000000e+00 : f32
    %14 = vector.broadcast %cst_10 : f32 to vector<128x256xf32>
    %15 = arith.addf %14, %13 : vector<128x256xf32>
    %16 = arith.mulf %10, %15 : vector<128x256xf32>
    %17 = arith.truncf %16 : vector<128x256xf32> to vector<128x256xbf16>
    %c0_11 = arith.constant 0 : index
    %c0_12 = arith.constant 0 : index
    %c0_13 = arith.constant 0 : index
    %18 = vector.load %arg8[%c0_11, %c0_12, %c0_13] : memref<1x256x128xbf16, #tpu.memory_space<vmem>>, vector<1x256x128xbf16>
    %19 = vector.shape_cast %18 : vector<1x256x128xbf16> to vector<256x128xbf16>
    %cst_14 = arith.constant dense<0.000000e+00> : vector<128x128xf32>
    %20 = tpu.matmul %17, %19, %cst_14 {dimension_numbers = #tpu.dot_dimension_numbers<[1], [0], [0], [1], [0, 0, 1, 1], [], []>} : vector<128x256xbf16>, vector<256x128xbf16>, vector<128x128xf32> -> vector<128x128xf32>
    %c0_15 = arith.constant 0 : index
    %c0_16 = arith.constant 0 : index
    %c0_17 = arith.constant 0 : index
    %21 = vector.load %arg9[%c0_15, %c0_16, %c0_17] : memref<1x1x128xf32, #tpu.memory_space<vmem>>, vector<1x1x128xf32>
    %22 = vector.shape_cast %21 : vector<1x1x128xf32> to vector<1x128xf32>
    %23 = vector.broadcast %22 : vector<1x128xf32> to vector<128x128xf32>
    %24 = arith.addf %20, %23 : vector<128x128xf32>
    %25 = vector.shape_cast %24 : vector<128x128xf32> to vector<1x128x128xf32>
    %26 = arith.truncf %25 : vector<1x128x128xf32> to vector<1x128x128xbf16>
    %c0_18 = arith.constant 0 : index
    %c0_19 = arith.constant 0 : index
    %c0_20 = arith.constant 0 : index
    %27 = vector.load %arg10[%c0_18, %c0_19, %c0_20] : memref<1x128x128xbf16, #tpu.memory_space<vmem>>, vector<1x128x128xbf16>
    tpu.vector_store %arg10[%c0_18, %c0_19, %c0_20], %26 {strides = array<i32>} : memref<1x128x128xbf16, #tpu.memory_space<vmem>>, vector<1x128x128xbf16>,
    return
  }
  func.func @transform_0(%arg0: i32, %arg1: i32, %arg2: memref<4xi32, #tpu.memory_space<smem>>, %arg3: memref<4xi32, #tpu.memory_space<smem>>, %arg4: memref<4xi32, #tpu.memory_space<smem>>) -> (i32, i32, i32) {
    %0 = arith.index_cast %arg0 : i32 to index
    %1 = memref.load %arg2[%0] : memref<4xi32, #tpu.memory_space<smem>>
    %c0_i32 = arith.constant 0 : i32
    %c0_i32_0 = arith.constant 0 : i32
    %c0_i32_1 = arith.constant 0 : i32
    return %1, %c0_i32, %c0_i32_0 : i32, i32, i32
  }
  func.func @transform_1(%arg0: i32, %arg1: i32, %arg2: memref<4xi32, #tpu.memory_space<smem>>, %arg3: memref<4xi32, #tpu.memory_space<smem>>, %arg4: memref<4xi32, #tpu.memory_space<smem>>) -> (i32, i32, i32) {
    %0 = arith.index_cast %arg0 : i32 to index
    %1 = memref.load %arg3[%0] : memref<4xi32, #tpu.memory_space<smem>>
    %c0_i32 = arith.constant 0 : i32
    %c0_i32_0 = arith.constant 0 : i32
    return %1, %c0_i32, %arg1 : i32, i32, i32
  }
  func.func @transform_2(%arg0: i32, %arg1: i32, %arg2: memref<4xi32, #tpu.memory_space<smem>>, %arg3: memref<4xi32, #tpu.memory_space<smem>>, %arg4: memref<4xi32, #tpu.memory_space<smem>>) -> (i32, i32, i32) {
    %0 = arith.index_cast %arg0 : i32 to index
    %1 = memref.load %arg3[%0] : memref<4xi32, #tpu.memory_space<smem>>
    %c0_i32 = arith.constant 0 : i32
    %c0_i32_0 = arith.constant 0 : i32
    return %1, %c0_i32, %arg1 : i32, i32, i32
  }
  func.func @transform_3(%arg0: i32, %arg1: i32, %arg2: memref<4xi32, #tpu.memory_space<smem>>, %arg3: memref<4xi32, #tpu.memory_space<smem>>, %arg4: memref<4xi32, #tpu.memory_space<smem>>) -> (i32, i32, i32) {
    %0 = arith.index_cast %arg0 : i32 to index
    %1 = memref.load %arg3[%0] : memref<4xi32, #tpu.memory_space<smem>>
    %c0_i32 = arith.constant 0 : i32
    %c0_i32_0 = arith.constant 0 : i32
    return %1, %arg1, %c0_i32 : i32, i32, i32
  }
  func.func @transform_4(%arg0: i32, %arg1: i32, %arg2: memref<4xi32, #tpu.memory_space<smem>>, %arg3: memref<4xi32, #tpu.memory_space<smem>>, %arg4: memref<4xi32, #tpu.memory_space<smem>>) -> (i32, i32, i32) {
    %0 = arith.index_cast %arg0 : i32 to index
    %1 = memref.load %arg3[%0] : memref<4xi32, #tpu.memory_space<smem>>
    %c0_i32 = arith.constant 0 : i32
    %c0_i32_0 = arith.constant 0 : i32
    %c0_i32_1 = arith.constant 0 : i32
    return %1, %c0_i32, %c0_i32_0 : i32, i32, i32
  }
  func.func @transform_5(%arg0: i32, %arg1: i32, %arg2: memref<4xi32, #tpu.memory_space<smem>>, %arg3: memref<4xi32, #tpu.memory_space<smem>>, %arg4: memref<4xi32, #tpu.memory_space<smem>>) -> (i32, i32, i32) {
    %0 = arith.index_cast %arg0 : i32 to index
    %1 = memref.load %arg4[%0] : memref<4xi32, #tpu.memory_space<smem>>
    %c0_i32 = arith.constant 0 : i32
    %c0_i32_0 = arith.constant 0 : i32
    %c0_i32_1 = arith.constant 0 : i32
    return %1, %c0_i32, %c0_i32_0 : i32, i32, i32
  }
}

</mosaic_0001>

<llo_original>
// kernel: tpu_custom_call.1
$region0: #{tpu_custom_call.1}
  #allocation0 [shape = 'u32[]', space=smem, size = 0x4, offset = 0x4, fixed_abs, tag = 'smem constant byte address 0x4 - core index']
  #allocation1 [shape = 'u32[144,128]{1,0:T(1,128)}', space=vmem, size = 0x12000, scoped, tag = 'internal scratch']
  #allocation2 [shape = 's32[1]{0}', space=sflag, size = 0x4, scoped, tag = 'scoped memory for tpu_custom_call.1']
  #allocation3 [shape = 'u8[512]{0}', space=smem, size = 0x200, scoped, tag = 'prefetched SMEM operand 0']
  #allocation4 [shape = 'u8[512]{0}', space=smem, size = 0x200, scoped, tag = 'prefetched SMEM operand 1']
  #allocation5 [shape = 'u8[512]{0}', space=smem, size = 0x200, scoped, tag = 'prefetched SMEM operand 2']
  %s0 = inlined_call_operand.hbm [shape: s32[4], index: 0, kind: input, shape index: {}]
  %s1 = inlined_call_operand.vmem [shape: s32[4], index: 1, kind: input, shape index: {}]
  %s2 = inlined_call_operand.vmem [shape: s32[4], index: 2, kind: input, shape index: {}]
  %s3 = inlined_call_operand.hbm [shape: bf16[2,128,128], index: 3, kind: input, shape index: {}]
  %s4 = inlined_call_operand.hbm [shape: bf16[8,128,256], index: 4, kind: input, shape index: {}]
  %s5 = inlined_call_operand.vmem [shape: f32[8,1,256], index: 5, kind: input, shape index: {}]
  %s6 = inlined_call_operand.hbm [shape: bf16[8,256,128], index: 6, kind: input, shape index: {}]
  %s7 = inlined_call_operand.vmem [shape: f32[8,1,128], index: 7, kind: input, shape index: {}]
  %s8 = inlined_call_operand.hbm [shape: bf16[4,128,128], index: 8, kind: output, shape index: {}]
  %s9 = sld [smem:[#allocation0]]
  $region65: #{tpu_custom_call.1} parent=0
    _
  %s11 = ssub.s32 1, %s9
  %s12 = scalar_select 0, %s11, %s9
  %14 = dma.hbm_to_smem %s0, 16, [#allocation3], [#allocation2]
  %s15 = sshll.u32 %s1, 4
  %s16 = int_to_ptr.vmem [resolvable:$true] %s15
  %18 = dma.vmem_to_smem %s16, 16, [#allocation4], [#allocation2]
  %s19 = sshll.u32 %s2, 4
  %s20 = int_to_ptr.vmem [resolvable:$true] %s19
  %22 = dma.vmem_to_smem %s20, 16, [#allocation5], [#allocation2]
  %23 = dma.done [#allocation2], 48
  %24 = sfence
  $region1: #{tpu_custom_call.1} parent=0
    #allocation6 [shape = 'u8[65536]{0}', space=vmem, size = 0x10000, scoped, tag = 'input window, operand 3']
    #allocation7 [shape = 's32[2]{0}', space=sflag, size = 0x8, scoped, tag = 'scoped memory for tpu_custom_call.1']
    #allocation8 [shape = 's32[2]{0}', space=sflag, size = 0x8, scoped, tag = 'scoped memory for tpu_custom_call.1']
    #allocation9 [shape = 'u8[131072]{0}', space=vmem, size = 0x20000, scoped, tag = 'input window, operand 4']
    #allocation10 [shape = 's32[2]{0}', space=sflag, size = 0x8, scoped, tag = 'scoped memory for tpu_custom_call.1']
    #allocation11 [shape = 'u8[131072]{0}', space=vmem, size = 0x20000, scoped, tag = 'input window, operand 6']
    #allocation12 [shape = 'u8[65536]{0}', space=vmem, size = 0x10000, scoped, tag = 'output window, operand 0']
    %25 = vsyncpa [#allocation7], 0
    %s26 = scalar_lea.sflag [#allocation7], 1
    %27 = vsyncpa %s26, 0
    %28 = vsyncpa [#allocation10], 0
    %s29 = scalar_lea.sflag [#allocation10], 1
    %30 = vsyncpa %s29, 0
    %31 = vsyncpa [#allocation8], 0
    %s32 = scalar_lea.sflag [#allocation8], 1
    %33 = vsyncpa %s32, 0
    loop: start=0, step=1, limit=6
    $region2: #{tpu_custom_call.1} parent=1 // loop_pre_header
      _
    $region3: #{tpu_custom_call.1} parent=1 // loop_header
      %s35 = sphi 0, %s39
      %p36 = scmp.ge.s32.totalorder %s35, 6
      %s42 = sphi 0, %s54
      %s43 = sphi 0, %s50
      %s44 = sphi 0, %s42
      %s45 = sphi 0, %s43
      %s46 = sphi 0, %s44
      %s47 = sphi 0, %s45
      %s59 = sphi 0, %s61
      %s62 = sphi 0, %s59
      %s63 = sphi 0, %s62
      %s79 = sphi 0, %s63
      %s89 = sphi 0, %s91
      %s92 = sphi 0, %s89
      %s93 = sphi 0, %s92
      %s109 = sphi 0, %s93
      %s119 = sphi 0, %s121
      %s122 = sphi 0, %s119
      %s123 = sphi 0, %s122
      %s139 = sphi 0, %s123
      %s149 = sphi 0, %s151
      %s152 = sphi 0, %s149
      %s153 = sphi 0, %s152
      %s169 = sphi 0, %s153
      %s177 = sphi 0, %s179
      %s180 = sphi 0, %s177
      %s181 = sphi 0, %s180
      %s197 = sphi 0, %s181
      %s205 = sphi 0, %s207
      %s208 = sphi 0, %s205
      %s209 = sphi 0, %s208
      %s225 = sphi 0, %s209
    $region4: #{tpu_custom_call.1} parent=1 // loop_header_branch
      %38 = sbr.rel (%p36) target = $region8
    $region5: #{tpu_custom_call.1} parent=1 // loop_body
      %s40 = ssub.s32 %s35, 1
      %s41 = ssub.s32 %s35, 2
      %s48 = sadd.s32 1, %s43
      %p49 = scmp.ge.s32.totalorder %s48, 1
      %s50 = scalar_select %p49, 0, %s48
      %s51 = sadd.s32 1, %s42
      %s52 = scalar_select %p49, %s51, %s42
      %p53 = scmp.ge.s32.totalorder %s52, 4
      %s54 = scalar_select %p53, 0, %s52
      %s55 = sld [smem:[#allocation3 + %s42]]
      %s56 = sld [smem:[#allocation3 + %s54]]
      %s57 = ssub.s32 %s55, %s56
      %p58 = scmp.eq.s32.totalorder %s57, 0
      %s60 = sadd.s32 %s59, 1
      %s61 = scalar_select %p58, %s59, %s60
      %p64 = pneg %p58
      %p65 = scmp.eq.s32.totalorder %s35, 3
      %p66 = por %p64, %p65
      %p67 = scmp.ne.s32.totalorder %s59, %s62
      %p68 = scmp.eq.s32.totalorder %s35, 0
      %p69 = por %p67, %p68
      %p70 = scmp.ne.s32.totalorder %s59, %s62
      %p71 = scmp.eq.s32.totalorder %s40, 3
      %p72 = por %p70, %p71
      %p73 = scmp.ne.s32.totalorder %s62, %s63
      %p74 = scmp.eq.s32.totalorder %s40, 0
      %p75 = por %p73, %p74
      %p76 = scmp.ne.s32.totalorder %s62, %s63
      %p77 = scmp.eq.s32.totalorder %s41, 3
      %p78 = por %p76, %p77
      %p80 = scmp.ne.s32.totalorder %s63, %s79
      %p81 = scmp.eq.s32.totalorder %s41, 0
      %p82 = por %p80, %p81
      %s83 = sld [smem:[#allocation4 + %s42]]
      %s84 = sld [smem:[#allocation4 + %s54]]
      %s85 = ssub.s32 %s83, %s84
      %s86 = ssub.s32 %s43, %s50
      %s87 = sor.u32 %s85, %s86
      %p88 = scmp.eq.s32.totalorder %s87, 0
      %s90 = sadd.s32 %s89, 1
      %s91 = scalar_select %p88, %s89, %s90
      %p94 = pneg %p88
      %p95 = scmp.eq.s32.totalorder %s35, 3
      %p96 = por %p94, %p95
      %p97 = scmp.ne.s32.totalorder %s89, %s92
      %p98 = scmp.eq.s32.totalorder %s35, 0
      %p99 = por %p97, %p98
      %p100 = scmp.ne.s32.totalorder %s89, %s92
      %p101 = scmp.eq.s32.totalorder %s40, 3
      %p102 = por %p100, %p101
      %p103 = scmp.ne.s32.totalorder %s92, %s93
      %p104 = scmp.eq.s32.totalorder %s40, 0
      %p105 = por %p103, %p104
      %p106 = scmp.ne.s32.totalorder %s92, %s93
      %p107 = scmp.eq.s32.totalorder %s41, 3
      %p108 = por %p106, %p107
      %p110 = scmp.ne.s32.totalorder %s93, %s109
      %p111 = scmp.eq.s32.totalorder %s41, 0
      %p112 = por %p110, %p111
      %s113 = sld [smem:[#allocation4 + %s42]]
      %s114 = sld [smem:[#allocation4 + %s54]]
      %s115 = ssub.s32 %s113, %s114
      %s116 = ssub.s32 %s43, %s50
      %s117 = sor.u32 %s115, %s116
      %p118 = scmp.eq.s32.totalorder %s117, 0
      %s120 = sadd.s32 %s119, 1
      %s121 = scalar_select %p118, %s119, %s120
      %p124 = pneg %p118
      %p125 = scmp.eq.s32.totalorder %s35, 3
      %p126 = por %p124, %p125
      %p127 = scmp.ne.s32.totalorder %s119, %s122
      %p128 = scmp.eq.s32.totalorder %s35, 0
      %p129 = por %p127, %p128
      %p130 = scmp.ne.s32.totalorder %s119, %s122
      %p131 = scmp.eq.s32.totalorder %s40, 3
      %p132 = por %p130, %p131
      %p133 = scmp.ne.s32.totalorder %s122, %s123
      %p134 = scmp.eq.s32.totalorder %s40, 0
      %p135 = por %p133, %p134
      %p136 = scmp.ne.s32.totalorder %s122, %s123
      %p137 = scmp.eq.s32.totalorder %s41, 3
      %p138 = por %p136, %p137
      %p140 = scmp.ne.s32.totalorder %s123, %s139
      %p141 = scmp.eq.s32.totalorder %s41, 0
      %p142 = por %p140, %p141
      %s143 = sld [smem:[#allocation4 + %s42]]
      %s144 = sld [smem:[#allocation4 + %s54]]
      %s145 = ssub.s32 %s143, %s144
      %s146 = ssub.s32 %s43, %s50
      %s147 = sor.u32 %s145, %s146
      %p148 = scmp.eq.s32.totalorder %s147, 0
      %s150 = sadd.s32 %s149, 1
      %s151 = scalar_select %p148, %s149, %s150
      %p154 = pneg %p148
      %p155 = scmp.eq.s32.totalorder %s35, 3
      %p156 = por %p154, %p155
      %p157 = scmp.ne.s32.totalorder %s149, %s152
      %p158 = scmp.eq.s32.totalorder %s35, 0
      %p159 = por %p157, %p158
      %p160 = scmp.ne.s32.totalorder %s149, %s152
      %p161 = scmp.eq.s32.totalorder %s40, 3
      %p162 = por %p160, %p161
      %p163 = scmp.ne.s32.totalorder %s152, %s153
      %p164 = scmp.eq.s32.totalorder %s40, 0
      %p165 = por %p163, %p164
      %p166 = scmp.ne.s32.totalorder %s152, %s153
      %p167 = scmp.eq.s32.totalorder %s41, 3
      %p168 = por %p166, %p167
      %p170 = scmp.ne.s32.totalorder %s153, %s169
      %p171 = scmp.eq.s32.totalorder %s41, 0
      %p172 = por %p170, %p171
      %s173 = sld [smem:[#allocation4 + %s42]]
      %s174 = sld [smem:[#allocation4 + %s54]]
      %s175 = ssub.s32 %s173, %s174
      %p176 = scmp.eq.s32.totalorder %s175, 0
      %s178 = sadd.s32 %s177, 1
      %s179 = scalar_select %p176, %s177, %s178
      %p182 = pneg %p176
      %p183 = scmp.eq.s32.totalorder %s35, 3
      %p184 = por %p182, %p183
      %p185 = scmp.ne.s32.totalorder %s177, %s180
      %p186 = scmp.eq.s32.totalorder %s35, 0
      %p187 = por %p185, %p186
      %p188 = scmp.ne.s32.totalorder %s177, %s180
      %p189 = scmp.eq.s32.totalorder %s40, 3
      %p190 = por %p188, %p189
      %p191 = scmp.ne.s32.totalorder %s180, %s181
      %p192 = scmp.eq.s32.totalorder %s40, 0
      %p193 = por %p191, %p192
      %p194 = scmp.ne.s32.totalorder %s180, %s181
      %p195 = scmp.eq.s32.totalorder %s41, 3
      %p196 = por %p194, %p195
      %p198 = scmp.ne.s32.totalorder %s181, %s197
      %p199 = scmp.eq.s32.totalorder %s41, 0
      %p200 = por %p198, %p199
      %s201 = sld [smem:[#allocation5 + %s42]]
      %s202 = sld [smem:[#allocation5 + %s54]]
      %s203 = ssub.s32 %s201, %s202
      %p204 = scmp.eq.s32.totalorder %s203, 0
      %s206 = sadd.s32 %s205, 1
      %s207 = scalar_select %p204, %s205, %s206
      %p210 = pneg %p204
      %p211 = scmp.eq.s32.totalorder %s35, 3
      %p212 = por %p210, %p211
      %p213 = scmp.ne.s32.totalorder %s205, %s208
      %p214 = scmp.eq.s32.totalorder %s35, 0
      %p215 = por %p213, %p214
      %p216 = scmp.ne.s32.totalorder %s205, %s208
      %p217 = scmp.eq.s32.totalorder %s40, 3
      %p218 = por %p216, %p217
      %p219 = scmp.ne.s32.totalorder %s208, %s209
      %p220 = scmp.eq.s32.totalorder %s40, 0
      %p221 = por %p219, %p220
      %p222 = scmp.ne.s32.totalorder %s208, %s209
      %p223 = scmp.eq.s32.totalorder %s41, 3
      %p224 = por %p222, %p223
      %p226 = scmp.ne.s32.totalorder %s209, %s225
      %p227 = scmp.eq.s32.totalorder %s41, 0
      %p228 = por %p226, %p227
      %p229 = scmp.le.s32.totalorder 1, %s35
      %p230 = scmp.lt.s32.totalorder %s35, 5
      %p231 = pnand %p229, %p230
      %p232 = pneg %p231
      // Predicated region
      $region9: #{tpu_custom_call.1} parent=5 // pred_check
        _
      $region10: #{tpu_custom_call.1} parent=5 // pred_check_branch
        %234 = sbr.rel (%p231) target = $region12
      $region11: #{tpu_custom_call.1} parent=5 // pred_region
        %s235 = ssub.s32 %s35, 1
      $region12: #{tpu_custom_call.1} parent=5 // pred_fallthru
        _
      %p236 = scmp.lt.s32.totalorder %s35, 4
      // Predicated region
      $region13: #{tpu_custom_call.1} parent=5 // pred_check
        %p237 = pneg %p236
      $region14: #{tpu_custom_call.1} parent=5 // pred_check_branch
        %239 = sbr.rel (%p237) target = $region16
      $region15: #{tpu_custom_call.1} parent=5 // pred_region
        // Predicated region
        $region17: #{tpu_custom_call.1} parent=15 // pred_check
          %p240 = pneg %p69
        $region18: #{tpu_custom_call.1} parent=15 // pred_check_branch
          %242 = sbr.rel (%p240) target = $region20
        $region19: #{tpu_custom_call.1} parent=15 // pred_region
          %s243 = sand.u32 %s59, 1
          %s244 = scalar_lea.sflag [#allocation7], %s243
          %s245 = sand.u32 %s59, 1
          %s246 = smul.addr %s245, 64
          %s247 = scalar_lea.vmem [#allocation6], %s246
          %s248 = sld [smem:[#allocation3 + %s42]]
          %s250 = ssub.s32 1024, 1024
          %251 = vsyncadd %s244, %s250
          %s252 = smul.addr %s248, 16
          %s253 = smul.addr %s252, 64
          %s254 = scalar_lea.hbm %s3, %s253
          %s255 = sshll.u32 %s247, 4
          %s256 = int_to_ptr.vmem [resolvable:$true] %s255
          %261 = dma.hbm_to_vmem [thread:$0]  %s254, 1024, %s256, %s244, 64, 64, 4
        $region20: #{tpu_custom_call.1} parent=15 // pred_fallthru
          _
        // Predicated region
        $region21: #{tpu_custom_call.1} parent=15 // pred_check
          %p262 = pneg %p99
        $region22: #{tpu_custom_call.1} parent=15 // pred_check_branch
          %264 = sbr.rel (%p262) target = $region24
        $region23: #{tpu_custom_call.1} parent=15 // pred_region
          %s265 = sand.u32 %s35, 1
          %s266 = scalar_lea.sflag [#allocation10], %s265
          %s267 = sand.u32 %s89, 1
          %s268 = smul.addr %s267, 128
          %s269 = scalar_lea.vmem [#allocation9], %s268
          %s270 = sld [smem:[#allocation4 + %s42]]
          %s271 = smul.u32 2, %s43
          %s273 = ssub.s32 2048, 2048
          %274 = vsyncadd %s266, %s273
          %s275 = smul.addr %s270, 32
          %s276 = sadd.s32 %s271, %s275
          %s277 = smul.addr %s276, 64
          %s278 = scalar_lea.hbm %s4, %s277
          %s279 = sshll.u32 %s269, 4
          %s280 = int_to_ptr.vmem [resolvable:$true] %s279
          %285 = dma.hbm_to_vmem [thread:$0]  %s278, 2048, %s280, %s266, 128, 128, 8
        $region24: #{tpu_custom_call.1} parent=15 // pred_fallthru
          _
        // Predicated region
        $region25: #{tpu_custom_call.1} parent=15 // pred_check
          %p286 = pneg %p129
        $region26: #{tpu_custom_call.1} parent=15 // pred_check_branch
          %288 = sbr.rel (%p286) target = $region28
        $region27: #{tpu_custom_call.1} parent=15 // pred_region
          %s289 = sld [smem:[#allocation4 + %s42]]
          %s290 = smul.u32 2, %s43
          %p291 = scmp.lt.s32.totalorder %s289, 7
          %s292 = scalar_select %p291, %s289, 7
          %p293 = scmp.lt.s32.totalorder %s290, 1
          %s294 = scalar_select %p293, %s290, 1
          %s295 = smul.addr %s292, 2
          %s296 = sadd.s32 %s294, %s295
          %s297 = scalar_lea.vmem %s5, %s296
          %s298 = sld [smem:[#allocation4 + %s42]]
          %s299 = smul.u32 2, %s43
        $region28: #{tpu_custom_call.1} parent=15 // pred_fallthru
          _
        // Predicated region
        $region29: #{tpu_custom_call.1} parent=15 // pred_check
          %p300 = pneg %p159
        $region30: #{tpu_custom_call.1} parent=15 // pred_check_branch
          %302 = sbr.rel (%p300) target = $region32
        $region31: #{tpu_custom_call.1} parent=15 // pred_region
          %s303 = sand.u32 %s35, 1
          %s304 = scalar_lea.sflag [#allocation10], %s303
          %s305 = sand.u32 %s149, 1
          %s306 = smul.addr %s305, 128
          %s307 = scalar_lea.vmem [#allocation11], %s306
          %s308 = sld [smem:[#allocation4 + %s42]]
          %s309 = smul.u32 32, %s43
          %s311 = ssub.s32 2048, 2048
          %312 = vsyncadd %s304, %s311
          %s313 = smul.addr %s308, 32
          %s314 = sadd.s32 %s309, %s313
          %s315 = smul.addr %s314, 64
          %s316 = scalar_lea.hbm %s6, %s315
          %s317 = sshll.u32 %s307, 4
          %s318 = int_to_ptr.vmem [resolvable:$true] %s317
          %323 = dma.hbm_to_vmem [thread:$0]  %s316, 2048, %s318, %s304, 64, 64, 4
        $region32: #{tpu_custom_call.1} parent=15 // pred_fallthru
          _
        // Predicated region
        $region33: #{tpu_custom_call.1} parent=15 // pred_check
          %p324 = pneg %p187
        $region34: #{tpu_custom_call.1} parent=15 // pred_check_branch
          %326 = sbr.rel (%p324) target = $region36
        $region35: #{tpu_custom_call.1} parent=15 // pred_region
          %s327 = sld [smem:[#allocation4 + %s42]]
          %p328 = scmp.lt.s32.totalorder %s327, 7
          %s329 = scalar_select %p328, %s327, 7
          %s330 = scalar_lea.vmem %s7, %s329
          %s331 = sld [smem:[#allocation4 + %s42]]
        $region36: #{tpu_custom_call.1} parent=15 // pred_fallthru
          _
      $region16: #{tpu_custom_call.1} parent=5 // pred_fallthru
        _
      %p332 = scmp.le.s32.totalorder 1, %s35
      %p333 = scmp.lt.s32.totalorder %s35, 5
      %p334 = pnand %p332, %p333
      %p335 = pneg %p334
      // Predicated region
      $region37: #{tpu_custom_call.1} parent=5 // pred_check
        _
      $region38: #{tpu_custom_call.1} parent=5 // pred_check_branch
        %337 = sbr.rel (%p334) target = $region40
      $region39: #{tpu_custom_call.1} parent=5 // pred_region
        %s338 = ssub.s32 %s35, 1
        %s339 = sand.u32 %s62, 1
        %s340 = scalar_lea.sflag [#allocation7], %s339
        %s341 = sand.u32 %s62, 1
        %s342 = smul.addr %s341, 64
        %s343 = scalar_lea.vmem [#allocation6], %s342
        // Predicated region
        $region41: #{tpu_custom_call.1} parent=39 // pred_check
          %p344 = pneg %p75
        $region42: #{tpu_custom_call.1} parent=39 // pred_check_branch
          %346 = sbr.rel (%p344) target = $region44
        $region43: #{tpu_custom_call.1} parent=39 // pred_region
          %347 = dma.done %s340, 1024
        $region44: #{tpu_custom_call.1} parent=39 // pred_fallthru
          _
        %s348 = sand.u32 %s40, 1
        %s349 = scalar_lea.sflag [#allocation10], %s348
        %s350 = sand.u32 %s92, 1
        %s351 = smul.addr %s350, 128
        %s352 = scalar_lea.vmem [#allocation9], %s351
        // Predicated region
        $region45: #{tpu_custom_call.1} parent=39 // pred_check
          %p353 = pneg %p105
        $region46: #{tpu_custom_call.1} parent=39 // pred_check_branch
          %355 = sbr.rel (%p353) target = $region48
        $region47: #{tpu_custom_call.1} parent=39 // pred_region
          %356 = dma.done %s349, 2048
        $region48: #{tpu_custom_call.1} parent=39 // pred_fallthru
          _
        %s357 = sand.u32 %s40, 1
        %s358 = scalar_lea.sflag [#allocation10], %s357
        %s359 = sand.u32 %s152, 1
        %s360 = smul.addr %s359, 128
        %s361 = scalar_lea.vmem [#allocation11], %s360
        // Predicated region
        $region49: #{tpu_custom_call.1} parent=39 // pred_check
          %p362 = pneg %p165
        $region50: #{tpu_custom_call.1} parent=39 // pred_check_branch
          %364 = sbr.rel (%p362) target = $region52
        $region51: #{tpu_custom_call.1} parent=39 // pred_region
          %365 = dma.done %s358, 2048
        $region52: #{tpu_custom_call.1} parent=39 // pred_fallthru
          _
        %s366 = sand.u32 %s62, 1
        %s367 = scalar_lea.sflag [#allocation7], %s366
        %s368 = sand.u32 %s62, 1
        %s369 = smul.addr %s368, 64
        %s370 = scalar_lea.vmem [#allocation6], %s369
        %p371 = pneg %p75
        %p372 = pneg %p72
        %s373 = sand.u32 %s40, 1
        %s374 = scalar_lea.sflag [#allocation10], %s373
        %s375 = sand.u32 %s92, 1
        %s376 = smul.addr %s375, 128
        %s377 = scalar_lea.vmem [#allocation9], %s376
        %p378 = pneg %p105
        %p379 = pneg %p102
        %s380 = sld [smem:[#allocation4 + %s44]]
        %s381 = smul.u32 2, %s45
        %p382 = scmp.lt.s32.totalorder %s380, 7
        %s383 = scalar_select %p382, %s380, 7
        %p384 = scmp.lt.s32.totalorder %s381, 1
        %s385 = scalar_select %p384, %s381, 1
        %s386 = smul.addr %s383, 2
        %s387 = sadd.s32 %s385, %s386
        %s388 = scalar_lea.vmem %s5, %s387
        %p389 = pneg %p135
        %p390 = pneg %p132
        %s391 = sand.u32 %s40, 1
        %s392 = scalar_lea.sflag [#allocation10], %s391
        %s393 = sand.u32 %s152, 1
        %s394 = smul.addr %s393, 128
        %s395 = scalar_lea.vmem [#allocation11], %s394
        %p396 = pneg %p165
        %p397 = pneg %p162
        %s398 = sld [smem:[#allocation4 + %s44]]
        %p399 = scmp.lt.s32.totalorder %s398, 7
        %s400 = scalar_select %p399, %s398, 7
        %s401 = scalar_lea.vmem %s7, %s400
        %p402 = pneg %p193
        %p403 = pneg %p190
        %p404 = pneg %p221
        %p405 = pneg %p218
        %s406 = sand.u32 %s208, 1
        %s407 = scalar_lea.sflag [#allocation8], %s406
        %s408 = sand.u32 %s208, 1
        %s409 = smul.addr %s408, 64
        %s410 = scalar_lea.vmem [#allocation12], %s409
        %s411 = sld [smem:[#allocation3 + %s44]]
        %s412 = sld [smem:[#allocation4 + %s44]]
        %s413 = smul.u32 2, %s45
        %s414 = sld [smem:[#allocation4 + %s44]]
        %s415 = smul.u32 2, %s45
        %p416 = scmp.lt.s32.totalorder %s414, 7
        %s417 = scalar_select %p416, %s414, 7
        %p418 = scmp.lt.s32.totalorder %s415, 1
        %s419 = scalar_select %p418, %s415, 1
        %s420 = smul.addr %s417, 2
        %s421 = sadd.s32 %s419, %s420
        %s422 = scalar_lea.vmem %s5, %s421
        %s423 = sld [smem:[#allocation4 + %s44]]
        %s424 = smul.u32 2, %s45
        %s425 = sld [smem:[#allocation4 + %s44]]
        %s426 = smul.u32 32, %s45
        %s427 = sld [smem:[#allocation4 + %s44]]
        %p428 = scmp.lt.s32.totalorder %s427, 7
        %s429 = scalar_select %p428, %s427, 7
        %s430 = scalar_lea.vmem %s7, %s429
        %s431 = sld [smem:[#allocation4 + %s44]]
        %s432 = sld [smem:[#allocation5 + %s44]]
        %v434 = vld [vmem:[%s343] sm:$0xf]
        %v435 = vld [vmem:[%s343 + $0x4] sm:$0xf]
        %v436 = vld [vmem:[%s343 + $0x8] sm:$0xf]
        %v437 = vld [vmem:[%s343 + $0xc] sm:$0xf]
        %v438 = vld [vmem:[%s343 + $0x10] sm:$0xf]
        %v439 = vld [vmem:[%s343 + $0x14] sm:$0xf]
        %v440 = vld [vmem:[%s343 + $0x18] sm:$0xf]
        %v441 = vld [vmem:[%s343 + $0x1c] sm:$0xf]
        %v442 = vld [vmem:[%s343 + $0x20] sm:$0xf]
        %v443 = vld [vmem:[%s343 + $0x24] sm:$0xf]
        %v444 = vld [vmem:[%s343 + $0x28] sm:$0xf]
        %v445 = vld [vmem:[%s343 + $0x2c] sm:$0xf]
        %v446 = vld [vmem:[%s343 + $0x30] sm:$0xf]
        %v447 = vld [vmem:[%s343 + $0x34] sm:$0xf]
        %v448 = vld [vmem:[%s343 + $0x38] sm:$0xf]
        %v449 = vld [vmem:[%s343 + $0x3c] sm:$0xf]
        %v450 = vld [vmem:[%s352] sm:$0xff]
        %v451 = vld [vmem:[%s352 + $0x8] sm:$0xff]
        %v452 = vld [vmem:[%s352 + $0x10] sm:$0xff]
        %v453 = vld [vmem:[%s352 + $0x18] sm:$0xff]
        %v454 = vld [vmem:[%s352 + $0x20] sm:$0xff]
        %v455 = vld [vmem:[%s352 + $0x28] sm:$0xff]
        %v456 = vld [vmem:[%s352 + $0x30] sm:$0xff]
        %v457 = vld [vmem:[%s352 + $0x38] sm:$0xff]
        %v458 = vld [vmem:[%s352 + $0x40] sm:$0xff]
        %v459 = vld [vmem:[%s352 + $0x48] sm:$0xff]
        %v460 = vld [vmem:[%s352 + $0x50] sm:$0xff]
        %v461 = vld [vmem:[%s352 + $0x58] sm:$0xff]
        %v462 = vld [vmem:[%s352 + $0x60] sm:$0xff]
        %v463 = vld [vmem:[%s352 + $0x68] sm:$0xff]
        %v464 = vld [vmem:[%s352 + $0x70] sm:$0xff]
        %v465 = vld [vmem:[%s352 + $0x78] sm:$0xff]
        %v466 = vld [vmem:[%s422] sm:$0x3]
        %v468 = vlaneseq
        %v469 = vshrl.u32 %v468, 7
        %v470 = vsub.s32 0, %v469
        %v471 = vrot.slane %v466, %v470
        %v472 = vlaneseq
        %v473 = vshrl.u32 %v472, 7
        %v474 = vsub.s32 1, %v473
        %v475 = vrot.slane %v466, %v474
        %v494 = vunpack.c.l.b16 %v434
        %v495 = vunpack.c.l.b16 %v435
        %v496 = vunpack.c.l.b16 %v436
        %v497 = vunpack.c.l.b16 %v437
        %v498 = vunpack.c.l.b16 %v438
        %v499 = vunpack.c.l.b16 %v439
        %v500 = vunpack.c.l.b16 %v440
        %v501 = vunpack.c.l.b16 %v441
        %v502 = vunpack.c.l.b16 %v442
        %v503 = vunpack.c.l.b16 %v443
        %v504 = vunpack.c.l.b16 %v444
        %v505 = vunpack.c.l.b16 %v445
        %v506 = vunpack.c.l.b16 %v446
        %v507 = vunpack.c.l.b16 %v447
        %v508 = vunpack.c.l.b16 %v448
        %v509 = vunpack.c.l.b16 %v449
        %v510 = vpack.c.b16 %v495, %v494
        %v511 = vpack.c.b16 %v497, %v496
        %v512 = vpack.c.b16 %v499, %v498
        %v513 = vpack.c.b16 %v501, %v500
        %v514 = vpack.c.b16 %v503, %v502
        %v515 = vpack.c.b16 %v505, %v504
        %v516 = vpack.c.b16 %v507, %v506
        %v517 = vpack.c.b16 %v509, %v508
        %v542 = vunpack.c.l.b16 %v450
        %v543 = vunpack.c.h.b16 %v450
        %v544 = vunpack.c.l.b16 %v451
        %v545 = vunpack.c.h.b16 %v451
        %v546 = vunpack.c.l.b16 %v452
        %v547 = vunpack.c.h.b16 %v452
        %v548 = vunpack.c.l.b16 %v453
        %v549 = vunpack.c.h.b16 %v453
        %v550 = vunpack.c.l.b16 %v454
        %v551 = vunpack.c.h.b16 %v454
        %v552 = vunpack.c.l.b16 %v455
        %v553 = vunpack.c.h.b16 %v455
        %v554 = vunpack.c.l.b16 %v456
        %v555 = vunpack.c.h.b16 %v456
        %v556 = vunpack.c.l.b16 %v457
        %v557 = vunpack.c.h.b16 %v457
        %v558 = vunpack.c.l.b16 %v458
        %v559 = vunpack.c.h.b16 %v458
        %v560 = vunpack.c.l.b16 %v459
        %v561 = vunpack.c.h.b16 %v459
        %v562 = vunpack.c.l.b16 %v460
        %v563 = vunpack.c.h.b16 %v460
        %v564 = vunpack.c.l.b16 %v461
        %v565 = vunpack.c.h.b16 %v461
        %v566 = vunpack.c.l.b16 %v462
        %v567 = vunpack.c.h.b16 %v462
        %v568 = vunpack.c.l.b16 %v463
        %v569 = vunpack.c.h.b16 %v463
        %v570 = vunpack.c.l.b16 %v464
        %v571 = vunpack.c.h.b16 %v464
        %v572 = vunpack.c.l.b16 %v465
        %v573 = vunpack.c.h.b16 %v465
        %v574 = vpack.c.b16 %v544, %v542
        %v575 = vpack.c.b16 %v545, %v543
        %v576 = vpack.c.b16 %v548, %v546
        %v577 = vpack.c.b16 %v549, %v547
        %v578 = vpack.c.b16 %v552, %v550
        %v579 = vpack.c.b16 %v553, %v551
        %v580 = vpack.c.b16 %v556, %v554
        %v581 = vpack.c.b16 %v557, %v555
        %v582 = vpack.c.b16 %v560, %v558
        %v583 = vpack.c.b16 %v561, %v559
        %v584 = vpack.c.b16 %v564, %v562
        %v585 = vpack.c.b16 %v565, %v563
        %v586 = vpack.c.b16 %v568, %v566
        %v587 = vpack.c.b16 %v569, %v567
        %v588 = vpack.c.b16 %v572, %v570
        %v589 = vpack.c.b16 %v573, %v571
        %606 = vmatprep.subr.bf16.mxu0 %v575
        %607 = vmatpush1.bf16.msra.mxu0 %v574
        %608 = vmatprep.subr.bf16.mxu0 %v577
        %609 = vmatpush1.bf16.msra.mxu0 %v576
        %610 = vmatprep.subr.bf16.mxu0 %v579
        %611 = vmatpush1.bf16.msra.mxu0 %v578
        %612 = vmatprep.subr.bf16.mxu0 %v581
        %613 = vmatpush1.bf16.msra.mxu0 %v580
        %614 = vmatprep.subr.bf16.mxu0 %v583
        %615 = vmatpush1.bf16.msra.mxu0 %v582
        %616 = vmatprep.subr.bf16.mxu0 %v585
        %617 = vmatpush1.bf16.msra.mxu0 %v584
        %618 = vmatprep.subr.bf16.mxu0 %v587
        %619 = vmatpush1.bf16.msra.mxu0 %v586
        %620 = vmatprep.subr.bf16.mxu0 %v589
        %621 = vmatpush1.bf16.msra.mxu0 %v588
        %622 = vmatprep.subr.bf16.mxu0 0
        %623 = vmatpush1.bf16.msra.mxu0 0
        %624 = vmatprep.subr.bf16.mxu0 0
        %625 = vmatpush1.bf16.msra.mxu0 0
        %626 = vmatprep.subr.bf16.mxu0 0
        %627 = vmatpush1.bf16.msra.mxu0 0
        %628 = vmatprep.subr.bf16.mxu0 0
        %629 = vmatpush1.bf16.msra.mxu0 0
        %630 = vmatprep.subr.bf16.mxu0 0
        %631 = vmatpush1.bf16.msra.mxu0 0
        %632 = vmatprep.subr.bf16.mxu0 0
        %633 = vmatpush1.bf16.msra.mxu0 0
        %634 = vmatprep.subr.bf16.mxu0 0
        %635 = vmatpush1.bf16.msra.mxu0 0
        %636 = vmatprep.subr.bf16.mxu0 0
        %637 = vmatpush1.bf16.msra.mxu0 0
        %638 = vmatprep.mubr.bf16.mxu0 0
        %639 = vmatmul.mubr.bf16.gmra.mrb[0].mxu0 %v510
        %v640 = vpop.f32.mrb[0].mxu0
        %v641 = vadd.f32 %v471, %v640
        %v642 = vpop.f32.mrb[0].mxu0
        %v643 = vadd.f32 %v475, %v642
        %v644 = vpop.f32.mrb[0].mxu0
        %v645 = vadd.f32 %v471, %v644
        %v646 = vpop.f32.mrb[0].mxu0
        %v647 = vadd.f32 %v475, %v646
        %648 = vmatprep.mubr.bf16.mxu0 0
        %649 = vmatmul.mubr.bf16.gmra.mrb[0].mxu0 %v511
        %v650 = vpop.f32.mrb[0].mxu0
        %v651 = vadd.f32 %v471, %v650
        %v652 = vpop.f32.mrb[0].mxu0
        %v653 = vadd.f32 %v475, %v652
        %v654 = vpop.f32.mrb[0].mxu0
        %v655 = vadd.f32 %v471, %v654
        %v656 = vpop.f32.mrb[0].mxu0
        %v657 = vadd.f32 %v475, %v656
        %658 = vmatprep.mubr.bf16.mxu0 0
        %659 = vmatmul.mubr.bf16.gmra.mrb[0].mxu0 %v512
        %v660 = vpop.f32.mrb[0].mxu0
        %v661 = vadd.f32 %v471, %v660
        %v662 = vpop.f32.mrb[0].mxu0
        %v663 = vadd.f32 %v475, %v662
        %v664 = vpop.f32.mrb[0].mxu0
        %v665 = vadd.f32 %v471, %v664
        %v666 = vpop.f32.mrb[0].mxu0
        %v667 = vadd.f32 %v475, %v666
        %668 = vmatprep.mubr.bf16.mxu0 0
        %669 = vmatmul.mubr.bf16.gmra.mrb[0].mxu0 %v513
        %v670 = vpop.f32.mrb[0].mxu0
        %v671 = vadd.f32 %v471, %v670
        %v672 = vpop.f32.mrb[0].mxu0
        %v673 = vadd.f32 %v475, %v672
        %v674 = vpop.f32.mrb[0].mxu0
        %v675 = vadd.f32 %v471, %v674
        %v676 = vpop.f32.mrb[0].mxu0
        %v677 = vadd.f32 %v475, %v676
        %678 = vmatprep.mubr.bf16.mxu0 0
        %679 = vmatmul.mubr.bf16.gmra.mrb[0].mxu0 %v514
        %v680 = vpop.f32.mrb[0].mxu0
        %v681 = vadd.f32 %v471, %v680
        %v682 = vpop.f32.mrb[0].mxu0
        %v683 = vadd.f32 %v475, %v682
        %v684 = vpop.f32.mrb[0].mxu0
        %v685 = vadd.f32 %v471, %v684
        %v686 = vpop.f32.mrb[0].mxu0
        %v687 = vadd.f32 %v475, %v686
        %688 = vmatprep.mubr.bf16.mxu0 0
        %689 = vmatmul.mubr.bf16.gmra.mrb[0].mxu0 %v515
        %v690 = vpop.f32.mrb[0].mxu0
        %v691 = vadd.f32 %v471, %v690
        %v692 = vpop.f32.mrb[0].mxu0
        %v693 = vadd.f32 %v475, %v692
        %v694 = vpop.f32.mrb[0].mxu0
        %v695 = vadd.f32 %v471, %v694
        %v696 = vpop.f32.mrb[0].mxu0
        %v697 = vadd.f32 %v475, %v696
        %698 = vmatprep.mubr.bf16.mxu0 0
        %699 = vmatmul.mubr.bf16.gmra.mrb[0].mxu0 %v516
        %v700 = vpop.f32.mrb[0].mxu0
        %v701 = vadd.f32 %v471, %v700
        %v702 = vpop.f32.mrb[0].mxu0
        %v703 = vadd.f32 %v475, %v702
        %v704 = vpop.f32.mrb[0].mxu0
        %v705 = vadd.f32 %v471, %v704
        %v706 = vpop.f32.mrb[0].mxu0
        %v707 = vadd.f32 %v475, %v706
        %708 = vmatprep.mubr.bf16.mxu0 0
        %709 = vmatmul.mubr.bf16.gmra.mrb[0].mxu0 %v517
        %v710 = vpop.f32.mrb[0].mxu0
        %v711 = vadd.f32 %v471, %v710
        %v712 = vpop.f32.mrb[0].mxu0
        %v713 = vadd.f32 %v475, %v712
        %v714 = vpop.f32.mrb[0].mxu0
        %v715 = vadd.f32 %v471, %v714
        %v716 = vpop.f32.mrb[0].mxu0
        %v717 = vadd.f32 %v475, %v716
        %718 = vdwg.mxu0
        %v719 = vmul.f32 %v641, 0.5
        %v720 = vmul.f32 %v643, 0.5
        %v721 = vmul.f32 %v645, 0.5
        %v722 = vmul.f32 %v647, 0.5
        %v723 = vmul.f32 %v651, 0.5
        %v724 = vmul.f32 %v653, 0.5
        %v725 = vmul.f32 %v655, 0.5
        %v726 = vmul.f32 %v657, 0.5
        %v727 = vmul.f32 %v661, 0.5
        %v728 = vmul.f32 %v663, 0.5
        %v729 = vmul.f32 %v665, 0.5
        %v730 = vmul.f32 %v667, 0.5
        %v731 = vmul.f32 %v671, 0.5
        %v732 = vmul.f32 %v673, 0.5
        %v733 = vmul.f32 %v675, 0.5
        %v734 = vmul.f32 %v677, 0.5
        %v735 = vmul.f32 %v681, 0.5
        %v736 = vmul.f32 %v683, 0.5
        %v737 = vmul.f32 %v685, 0.5
        %v738 = vmul.f32 %v687, 0.5
        %v739 = vmul.f32 %v691, 0.5
        %v740 = vmul.f32 %v693, 0.5
        %v741 = vmul.f32 %v695, 0.5
        %v742 = vmul.f32 %v697, 0.5
        %v743 = vmul.f32 %v701, 0.5
        %v744 = vmul.f32 %v703, 0.5
        %v745 = vmul.f32 %v705, 0.5
        %v746 = vmul.f32 %v707, 0.5
        %v747 = vmul.f32 %v711, 0.5
        %v748 = vmul.f32 %v713, 0.5
        %v749 = vmul.f32 %v715, 0.5
        %v750 = vmul.f32 %v717, 0.5
        %v751 = vmul.f32 %v641, 0.70710677
        %v752 = vmul.f32 %v643, 0.70710677
        %v753 = vmul.f32 %v645, 0.70710677
        %v754 = vmul.f32 %v647, 0.70710677
        %v755 = vmul.f32 %v651, 0.70710677
        %v756 = vmul.f32 %v653, 0.70710677
        %v757 = vmul.f32 %v655, 0.70710677
        %v758 = vmul.f32 %v657, 0.70710677
        %v759 = vmul.f32 %v661, 0.70710677
        %v760 = vmul.f32 %v663, 0.70710677
        %v761 = vmul.f32 %v665, 0.70710677
        %v762 = vmul.f32 %v667, 0.70710677
        %v763 = vmul.f32 %v671, 0.70710677
        %v764 = vmul.f32 %v673, 0.70710677
        %v765 = vmul.f32 %v675, 0.70710677
        %v766 = vmul.f32 %v677, 0.70710677
        %v767 = vmul.f32 %v681, 0.70710677
        %v768 = vmul.f32 %v683, 0.70710677
        %v769 = vmul.f32 %v685, 0.70710677
        %v770 = vmul.f32 %v687, 0.70710677
        %v771 = vmul.f32 %v691, 0.70710677
        %v772 = vmul.f32 %v693, 0.70710677
        %v773 = vmul.f32 %v695, 0.70710677
        %v774 = vmul.f32 %v697, 0.70710677
        %v775 = vmul.f32 %v701, 0.70710677
        %v776 = vmul.f32 %v703, 0.70710677
        %v777 = vmul.f32 %v705, 0.70710677
        %v778 = vmul.f32 %v707, 0.70710677
        %v779 = vmul.f32 %v711, 0.70710677
        %v780 = vmul.f32 %v713, 0.70710677
        %v781 = vmul.f32 %v715, 0.70710677
        %v782 = vmul.f32 %v717, 0.70710677
        %v783 = verf.f32.pop %v751
        %v784 = verf.f32.pop %v752
        %v785 = verf.f32.pop %v753
        %v786 = verf.f32.pop %v754
        %v787 = verf.f32.pop %v755
        %v788 = verf.f32.pop %v756
        %v789 = verf.f32.pop %v757
        %v790 = verf.f32.pop %v758
        %v791 = verf.f32.pop %v759
        %v792 = verf.f32.pop %v760
        %v793 = verf.f32.pop %v761
        %v794 = verf.f32.pop %v762
        %v795 = verf.f32.pop %v763
        %v796 = verf.f32.pop %v764
        %v797 = verf.f32.pop %v765
        %v798 = verf.f32.pop %v766
        %v799 = verf.f32.pop %v767
        %v800 = verf.f32.pop %v768
        %v801 = verf.f32.pop %v769
        %v802 = verf.f32.pop %v770
        %v803 = verf.f32.pop %v771
        %v804 = verf.f32.pop %v772
        %v805 = verf.f32.pop %v773
        %v806 = verf.f32.pop %v774
        %v807 = verf.f32.pop %v775
        %v808 = verf.f32.pop %v776
        %v809 = verf.f32.pop %v777
        %v810 = verf.f32.pop %v778
        %v811 = verf.f32.pop %v779
        %v812 = verf.f32.pop %v780
        %v813 = verf.f32.pop %v781
        %v814 = verf.f32.pop %v782
        %v815 = vadd.f32 %v783, 1.0
        %v816 = vadd.f32 %v784, 1.0
        %v817 = vadd.f32 %v785, 1.0
        %v818 = vadd.f32 %v786, 1.0
        %v819 = vadd.f32 %v787, 1.0
        %v820 = vadd.f32 %v788, 1.0
        %v821 = vadd.f32 %v789, 1.0
        %v822 = vadd.f32 %v790, 1.0
        %v823 = vadd.f32 %v791, 1.0
        %v824 = vadd.f32 %v792, 1.0
        %v825 = vadd.f32 %v793, 1.0
        %v826 = vadd.f32 %v794, 1.0
        %v827 = vadd.f32 %v795, 1.0
        %v828 = vadd.f32 %v796, 1.0
        %v829 = vadd.f32 %v797, 1.0
        %v830 = vadd.f32 %v798, 1.0
        %v831 = vadd.f32 %v799, 1.0
        %v832 = vadd.f32 %v800, 1.0
        %v833 = vadd.f32 %v801, 1.0
        %v834 = vadd.f32 %v802, 1.0
        %v835 = vadd.f32 %v803, 1.0
        %v836 = vadd.f32 %v804, 1.0
        %v837 = vadd.f32 %v805, 1.0
        %v838 = vadd.f32 %v806, 1.0
        %v839 = vadd.f32 %v807, 1.0
        %v840 = vadd.f32 %v808, 1.0
        %v841 = vadd.f32 %v809, 1.0
        %v842 = vadd.f32 %v810, 1.0
        %v843 = vadd.f32 %v811, 1.0
        %v844 = vadd.f32 %v812, 1.0
        %v845 = vadd.f32 %v813, 1.0
        %v846 = vadd.f32 %v814, 1.0
        %v847 = vmul.f32 %v719, %v815
        %v848 = vmul.f32 %v720, %v816
        %v849 = vmul.f32 %v721, %v817
        %v850 = vmul.f32 %v722, %v818
        %v851 = vmul.f32 %v723, %v819
        %v852 = vmul.f32 %v724, %v820
        %v853 = vmul.f32 %v725, %v821
        %v854 = vmul.f32 %v726, %v822
        %v855 = vmul.f32 %v727, %v823
        %v856 = vmul.f32 %v728, %v824
        %v857 = vmul.f32 %v729, %v825
        %v858 = vmul.f32 %v730, %v826
        %v859 = vmul.f32 %v731, %v827
        %v860 = vmul.f32 %v732, %v828
        %v861 = vmul.f32 %v733, %v829
        %v862 = vmul.f32 %v734, %v830
        %v863 = vmul.f32 %v735, %v831
        %v864 = vmul.f32 %v736, %v832
        %v865 = vmul.f32 %v737, %v833
        %v866 = vmul.f32 %v738, %v834
        %v867 = vmul.f32 %v739, %v835
        %v868 = vmul.f32 %v740, %v836
        %v869 = vmul.f32 %v741, %v837
        %v870 = vmul.f32 %v742, %v838
        %v871 = vmul.f32 %v743, %v839
        %v872 = vmul.f32 %v744, %v840
        %v873 = vmul.f32 %v745, %v841
        %v874 = vmul.f32 %v746, %v842
        %v875 = vmul.f32 %v747, %v843
        %v876 = vmul.f32 %v748, %v844
        %v877 = vmul.f32 %v749, %v845
        %v878 = vmul.f32 %v750, %v846
        %v879 = vpack.c.bf16 %v849, %v847
        %v880 = vpack.c.bf16 %v850, %v848
        %v881 = vpack.c.bf16 %v853, %v851
        %v882 = vpack.c.bf16 %v854, %v852
        %v883 = vpack.c.bf16 %v857, %v855
        %v884 = vpack.c.bf16 %v858, %v856
        %v885 = vpack.c.bf16 %v861, %v859
        %v886 = vpack.c.bf16 %v862, %v860
        %v887 = vpack.c.bf16 %v865, %v863
        %v888 = vpack.c.bf16 %v866, %v864
        %v889 = vpack.c.bf16 %v869, %v867
        %v890 = vpack.c.bf16 %v870, %v868
        %v891 = vpack.c.bf16 %v873, %v871
        %v892 = vpack.c.bf16 %v874, %v872
        %v893 = vpack.c.bf16 %v877, %v875
        %v894 = vpack.c.bf16 %v878, %v876
        %v895 = vld [vmem:[%s361] sm:$0xf]
        %v896 = vld [vmem:[%s361 + $0x4] sm:$0xf]
        %v897 = vld [vmem:[%s361 + $0x8] sm:$0xf]
        %v898 = vld [vmem:[%s361 + $0xc] sm:$0xf]
        %v899 = vld [vmem:[%s361 + $0x10] sm:$0xf]
        %v900 = vld [vmem:[%s361 + $0x14] sm:$0xf]
        %v901 = vld [vmem:[%s361 + $0x18] sm:$0xf]
        %v902 = vld [vmem:[%s361 + $0x1c] sm:$0xf]
        %v903 = vld [vmem:[%s361 + $0x20] sm:$0xf]
        %v904 = vld [vmem:[%s361 + $0x24] sm:$0xf]
        %v905 = vld [vmem:[%s361 + $0x28] sm:$0xf]
        %v906 = vld [vmem:[%s361 + $0x2c] sm:$0xf]
        %v907 = vld [vmem:[%s361 + $0x30] sm:$0xf]
        %v908 = vld [vmem:[%s361 + $0x34] sm:$0xf]
        %v909 = vld [vmem:[%s361 + $0x38] sm:$0xf]
        %v910 = vld [vmem:[%s361 + $0x3c] sm:$0xf]
        %v911 = vld [vmem:[%s361 + $0x40] sm:$0xf]
        %v912 = vld [vmem:[%s361 + $0x44] sm:$0xf]
        %v913 = vld [vmem:[%s361 + $0x48] sm:$0xf]
        %v914 = vld [vmem:[%s361 + $0x4c] sm:$0xf]
        %v915 = vld [vmem:[%s361 + $0x50] sm:$0xf]
        %v916 = vld [vmem:[%s361 + $0x54] sm:$0xf]
        %v917 = vld [vmem:[%s361 + $0x58] sm:$0xf]
        %v918 = vld [vmem:[%s361 + $0x5c] sm:$0xf]
        %v919 = vld [vmem:[%s361 + $0x60] sm:$0xf]
        %v920 = vld [vmem:[%s361 + $0x64] sm:$0xf]
        %v921 = vld [vmem:[%s361 + $0x68] sm:$0xf]
        %v922 = vld [vmem:[%s361 + $0x6c] sm:$0xf]
        %v923 = vld [vmem:[%s361 + $0x70] sm:$0xf]
        %v924 = vld [vmem:[%s361 + $0x74] sm:$0xf]
        %v925 = vld [vmem:[%s361 + $0x78] sm:$0xf]
        %v926 = vld [vmem:[%s361 + $0x7c] sm:$0xf]
        %v927 = vld [vmem:[%s430] sm:$0x1]
        %v929 = vlaneseq
        %v930 = vshrl.u32 %v929, 7
        %v931 = vsub.s32 0, %v930
        %v932 = vrot.slane %v927, %v931
        %v966 = vunpack.c.l.b16 %v895
        %v967 = vunpack.c.l.b16 %v896
        %v968 = vunpack.c.l.b16 %v897
        %v969 = vunpack.c.l.b16 %v898
        %v970 = vunpack.c.l.b16 %v899
        %v971 = vunpack.c.l.b16 %v900
        %v972 = vunpack.c.l.b16 %v901
        %v973 = vunpack.c.l.b16 %v902
        %v974 = vunpack.c.l.b16 %v903
        %v975 = vunpack.c.l.b16 %v904
        %v976 = vunpack.c.l.b16 %v905
        %v977 = vunpack.c.l.b16 %v906
        %v978 = vunpack.c.l.b16 %v907
        %v979 = vunpack.c.l.b16 %v908
        %v980 = vunpack.c.l.b16 %v909
        %v981 = vunpack.c.l.b16 %v910
        %v982 = vunpack.c.l.b16 %v911
        %v983 = vunpack.c.l.b16 %v912
        %v984 = vunpack.c.l.b16 %v913
        %v985 = vunpack.c.l.b16 %v914
        %v986 = vunpack.c.l.b16 %v915
        %v987 = vunpack.c.l.b16 %v916
        %v988 = vunpack.c.l.b16 %v917
        %v989 = vunpack.c.l.b16 %v918
        %v990 = vunpack.c.l.b16 %v919
        %v991 = vunpack.c.l.b16 %v920
        %v992 = vunpack.c.l.b16 %v921
        %v993 = vunpack.c.l.b16 %v922
        %v994 = vunpack.c.l.b16 %v923
        %v995 = vunpack.c.l.b16 %v924
        %v996 = vunpack.c.l.b16 %v925
        %v997 = vunpack.c.l.b16 %v926
        %v998 = vpack.c.b16 %v967, %v966
        %v999 = vpack.c.b16 %v969, %v968
        %v1000 = vpack.c.b16 %v971, %v970
        %v1001 = vpack.c.b16 %v973, %v972
        %v1002 = vpack.c.b16 %v975, %v974
        %v1003 = vpack.c.b16 %v977, %v976
        %v1004 = vpack.c.b16 %v979, %v978
        %v1005 = vpack.c.b16 %v981, %v980
        %v1006 = vpack.c.b16 %v983, %v982
        %v1007 = vpack.c.b16 %v985, %v984
        %v1008 = vpack.c.b16 %v987, %v986
        %v1009 = vpack.c.b16 %v989, %v988
        %v1010 = vpack.c.b16 %v991, %v990
        %v1011 = vpack.c.b16 %v993, %v992
        %v1012 = vpack.c.b16 %v995, %v994
        %v1013 = vpack.c.b16 %v997, %v996
        %1030 = vmatprep.subr.bf16.mxu0 0
        %1031 = vmatpush1.bf16.msra.mxu0 %v998
        %1032 = vmatprep.subr.bf16.mxu0 0
        %1033 = vmatpush1.bf16.msra.mxu0 %v999
        %1034 = vmatprep.subr.bf16.mxu0 0
        %1035 = vmatpush1.bf16.msra.mxu0 %v1000
        %1036 = vmatprep.subr.bf16.mxu0 0
        %1037 = vmatpush1.bf16.msra.mxu0 %v1001
        %1038 = vmatprep.subr.bf16.mxu0 0
        %1039 = vmatpush1.bf16.msra.mxu0 %v1002
        %1040 = vmatprep.subr.bf16.mxu0 0
        %1041 = vmatpush1.bf16.msra.mxu0 %v1003
        %1042 = vmatprep.subr.bf16.mxu0 0
        %1043 = vmatpush1.bf16.msra.mxu0 %v1004
        %1044 = vmatprep.subr.bf16.mxu0 0
        %1045 = vmatpush1.bf16.msra.mxu0 %v1005
        %1046 = vmatprep.subr.bf16.mxu0 0
        %1047 = vmatpush1.bf16.msra.mxu0 %v1006
        %1048 = vmatprep.subr.bf16.mxu0 0
        %1049 = vmatpush1.bf16.msra.mxu0 %v1007
        %1050 = vmatprep.subr.bf16.mxu0 0
        %1051 = vmatpush1.bf16.msra.mxu0 %v1008
        %1052 = vmatprep.subr.bf16.mxu0 0
        %1053 = vmatpush1.bf16.msra.mxu0 %v1009
        %1054 = vmatprep.subr.bf16.mxu0 0
        %1055 = vmatpush1.bf16.msra.mxu0 %v1010
        %1056 = vmatprep.subr.bf16.mxu0 0
        %1057 = vmatpush1.bf16.msra.mxu0 %v1011
        %1058 = vmatprep.subr.bf16.mxu0 0
        %1059 = vmatpush1.bf16.msra.mxu0 %v1012
        %1060 = vmatprep.subr.bf16.mxu0 0
        %1061 = vmatpush1.bf16.msra.mxu0 %v1013
        %1062 = vmatprep.mubr.bf16.mxu0 %v880
        %1063 = vmatmul.mubr.bf16.gmra.mrb[0].mxu0 %v879
        %v1064 = vpop.f32.mrb[0].mxu0
        %v1065 = vadd.f32 %v932, %v1064
        %v1066 = vpop.f32.mrb[0].mxu0
        %v1067 = vpop.f32.mrb[0].mxu0
        %v1068 = vadd.f32 %v932, %v1067
        %v1069 = vpop.f32.mrb[0].mxu0
        %1070 = vmatprep.mubr.bf16.mxu0 %v882
        %1071 = vmatmul.mubr.bf16.gmra.mrb[0].mxu0 %v881
        %v1072 = vpop.f32.mrb[0].mxu0
        %v1073 = vadd.f32 %v932, %v1072
        %v1074 = vpop.f32.mrb[0].mxu0
        %v1075 = vpop.f32.mrb[0].mxu0
        %v1076 = vadd.f32 %v932, %v1075
        %v1077 = vpop.f32.mrb[0].mxu0
        %1078 = vmatprep.mubr.bf16.mxu0 %v884
        %1079 = vmatmul.mubr.bf16.gmra.mrb[0].mxu0 %v883
        %v1080 = vpop.f32.mrb[0].mxu0
        %v1081 = vadd.f32 %v932, %v1080
        %v1082 = vpop.f32.mrb[0].mxu0
        %v1083 = vpop.f32.mrb[0].mxu0
        %v1084 = vadd.f32 %v932, %v1083
        %v1085 = vpop.f32.mrb[0].mxu0
        %1086 = vmatprep.mubr.bf16.mxu0 %v886
        %1087 = vmatmul.mubr.bf16.gmra.mrb[0].mxu0 %v885
        %v1088 = vpop.f32.mrb[0].mxu0
        %v1089 = vadd.f32 %v932, %v1088
        %v1090 = vpop.f32.mrb[0].mxu0
        %v1091 = vpop.f32.mrb[0].mxu0
        %v1092 = vadd.f32 %v932, %v1091
        %v1093 = vpop.f32.mrb[0].mxu0
        %1094 = vmatprep.mubr.bf16.mxu0 %v888
        %1095 = vmatmul.mubr.bf16.gmra.mrb[0].mxu0 %v887
        %v1096 = vpop.f32.mrb[0].mxu0
        %v1097 = vadd.f32 %v932, %v1096
        %v1098 = vpop.f32.mrb[0].mxu0
        %v1099 = vpop.f32.mrb[0].mxu0
        %v1100 = vadd.f32 %v932, %v1099
        %v1101 = vpop.f32.mrb[0].mxu0
        %1102 = vmatprep.mubr.bf16.mxu0 %v890
        %1103 = vmatmul.mubr.bf16.gmra.mrb[0].mxu0 %v889
        %v1104 = vpop.f32.mrb[0].mxu0
        %v1105 = vadd.f32 %v932, %v1104
        %v1106 = vpop.f32.mrb[0].mxu0
        %v1107 = vpop.f32.mrb[0].mxu0
        %v1108 = vadd.f32 %v932, %v1107
        %v1109 = vpop.f32.mrb[0].mxu0
        %1110 = vmatprep.mubr.bf16.mxu0 %v892
        %1111 = vmatmul.mubr.bf16.gmra.mrb[0].mxu0 %v891
        %v1112 = vpop.f32.mrb[0].mxu0
        %v1113 = vadd.f32 %v932, %v1112
        %v1114 = vpop.f32.mrb[0].mxu0
        %v1115 = vpop.f32.mrb[0].mxu0
        %v1116 = vadd.f32 %v932, %v1115
        %v1117 = vpop.f32.mrb[0].mxu0
        %1118 = vmatprep.mubr.bf16.mxu0 %v894
        %1119 = vmatmul.mubr.bf16.gmra.mrb[0].mxu0 %v893
        %v1120 = vpop.f32.mrb[0].mxu0
        %v1121 = vadd.f32 %v932, %v1120
        %v1122 = vpop.f32.mrb[0].mxu0
        %v1123 = vpop.f32.mrb[0].mxu0
        %v1124 = vadd.f32 %v932, %v1123
        %v1125 = vpop.f32.mrb[0].mxu0
        %1126 = vdwg.mxu0
        %v1127 = vpack.c.bf16 %v1068, %v1065
        %v1128 = vpack.c.bf16 %v1076, %v1073
        %v1129 = vpack.c.bf16 %v1084, %v1081
        %v1130 = vpack.c.bf16 %v1092, %v1089
        %v1131 = vpack.c.bf16 %v1100, %v1097
        %v1132 = vpack.c.bf16 %v1108, %v1105
        %v1133 = vpack.c.bf16 %v1116, %v1113
        %v1134 = vpack.c.bf16 %v1124, %v1121
        %v1143 = vunpack.c.l.b16 %v1127
        %v1144 = vunpack.c.h.b16 %v1127
        %v1145 = vunpack.c.l.b16 %v1128
        %v1146 = vunpack.c.h.b16 %v1128
        %v1147 = vunpack.c.l.b16 %v1129
        %v1148 = vunpack.c.h.b16 %v1129
        %v1149 = vunpack.c.l.b16 %v1130
        %v1150 = vunpack.c.h.b16 %v1130
        %v1151 = vunpack.c.l.b16 %v1131
        %v1152 = vunpack.c.h.b16 %v1131
        %v1153 = vunpack.c.l.b16 %v1132
        %v1154 = vunpack.c.h.b16 %v1132
        %v1155 = vunpack.c.l.b16 %v1133
        %v1156 = vunpack.c.h.b16 %v1133
        %v1157 = vunpack.c.l.b16 %v1134
        %v1158 = vunpack.c.h.b16 %v1134
        %v1159 = vpack.c.b16 %v1143, %v1143
        %v1160 = vpack.c.b16 %v1144, %v1144
        %v1161 = vpack.c.b16 %v1145, %v1145
        %v1162 = vpack.c.b16 %v1146, %v1146
        %v1163 = vpack.c.b16 %v1147, %v1147
        %v1164 = vpack.c.b16 %v1148, %v1148
        %v1165 = vpack.c.b16 %v1149, %v1149
        %v1166 = vpack.c.b16 %v1150, %v1150
        %v1167 = vpack.c.b16 %v1151, %v1151
        %v1168 = vpack.c.b16 %v1152, %v1152
        %v1169 = vpack.c.b16 %v1153, %v1153
        %v1170 = vpack.c.b16 %v1154, %v1154
        %v1171 = vpack.c.b16 %v1155, %v1155
        %v1172 = vpack.c.b16 %v1156, %v1156
        %v1173 = vpack.c.b16 %v1157, %v1157
        %v1174 = vpack.c.b16 %v1158, %v1158
        %1191 = vst [vmem:[%s410] sm:$0xf] %v1159
        %1192 = vst [vmem:[%s410 + $0x4] sm:$0xf] %v1160
        %1193 = vst [vmem:[%s410 + $0x8] sm:$0xf] %v1161
        %1194 = vst [vmem:[%s410 + $0xc] sm:$0xf] %v1162
        %1195 = vst [vmem:[%s410 + $0x10] sm:$0xf] %v1163
        %1196 = vst [vmem:[%s410 + $0x14] sm:$0xf] %v1164
        %1197 = vst [vmem:[%s410 + $0x18] sm:$0xf] %v1165
        %1198 = vst [vmem:[%s410 + $0x1c] sm:$0xf] %v1166
        %1199 = vst [vmem:[%s410 + $0x20] sm:$0xf] %v1167
        %1200 = vst [vmem:[%s410 + $0x24] sm:$0xf] %v1168
        %1201 = vst [vmem:[%s410 + $0x28] sm:$0xf] %v1169
        %1202 = vst [vmem:[%s410 + $0x2c] sm:$0xf] %v1170
        %1203 = vst [vmem:[%s410 + $0x30] sm:$0xf] %v1171
        %1204 = vst [vmem:[%s410 + $0x34] sm:$0xf] %v1172
        %1205 = vst [vmem:[%s410 + $0x38] sm:$0xf] %v1173
        %1206 = vst [vmem:[%s410 + $0x3c] sm:$0xf] %v1174
        %s1207 = sand.u32 %s208, 1
        %s1208 = scalar_lea.sflag [#allocation8], %s1207
        %s1209 = sand.u32 %s208, 1
        %s1210 = smul.addr %s1209, 64
        %s1211 = scalar_lea.vmem [#allocation12], %s1210
        // Predicated region
        $region53: #{tpu_custom_call.1} parent=39 // pred_check
          %p1212 = pneg %p218
        $region54: #{tpu_custom_call.1} parent=39 // pred_check_branch
          %1214 = sbr.rel (%p1212) target = $region56
        $region55: #{tpu_custom_call.1} parent=39 // pred_region
          %s1215 = sld [smem:[#allocation5 + %s44]]
          %s1217 = ssub.s32 1024, 1024
          %1218 = vsyncadd %s1208, %s1217
          %s1219 = smul.addr %s1215, 16
          %s1220 = smul.addr %s1219, 64
          %s1221 = scalar_lea.hbm %s8, %s1220
          %s1222 = sshll.u32 %s1211, 4
          %s1223 = int_to_ptr.vmem [resolvable:$true] %s1222
          %1228 = dma.vmem_to_hbm [thread:$0]  %s1223, 1024, %s1221, %s1208, 64, 64, 4
        $region56: #{tpu_custom_call.1} parent=39 // pred_fallthru
          _
      $region40: #{tpu_custom_call.1} parent=5 // pred_fallthru
        _
      %p1229 = scmp.le.s32.totalorder 2, %s35
      // Predicated region
      $region57: #{tpu_custom_call.1} parent=5 // pred_check
        %p1230 = pneg %p1229
      $region58: #{tpu_custom_call.1} parent=5 // pred_check_branch
        %1232 = sbr.rel (%p1230) target = $region60
      $region59: #{tpu_custom_call.1} parent=5 // pred_region
        %s1233 = ssub.s32 %s35, 2
        // Predicated region
        $region61: #{tpu_custom_call.1} parent=59 // pred_check
          %p1234 = pneg %p224
        $region62: #{tpu_custom_call.1} parent=59 // pred_check_branch
          %1236 = sbr.rel (%p1234) target = $region64
        $region63: #{tpu_custom_call.1} parent=59 // pred_region
          %s1237 = sand.u32 %s209, 1
          %s1238 = scalar_lea.sflag [#allocation8], %s1237
          %s1239 = sand.u32 %s209, 1
          %s1240 = smul.addr %s1239, 64
          %s1241 = scalar_lea.vmem [#allocation12], %s1240
          %1242 = dma.done %s1238, 1024
        $region64: #{tpu_custom_call.1} parent=59 // pred_fallthru
          _
      $region60: #{tpu_custom_call.1} parent=5 // pred_fallthru
        _
    $region6: #{tpu_custom_call.1} parent=1 // loop_footer
      %s39 = sadd.s32 1, %s35
    $region7: #{tpu_custom_call.1} parent=1 // loop_footer_branch
      %34 = sbr.rel target = $region3
    $region8: #{tpu_custom_call.1} parent=1 // loop_exit
      _
    %1243 = vsyncpa [#allocation7], 1
    %s1244 = scalar_lea.sflag [#allocation7], 1
    %1245 = vsyncpa %s1244, 1
    %1246 = vsyncpa [#allocation10], 1
    %s1247 = scalar_lea.sflag [#allocation10], 1
    %1248 = vsyncpa %s1247, 1
    %1249 = vsyncpa [#allocation8], 1
    %s1250 = scalar_lea.sflag [#allocation8], 1
    %1251 = vsyncpa %s1250, 1

</llo_original>
